<compile_context>
chip_gen: v6e
topology: v6e:2x2x1
jax: 0.10.0
libtpu: 0.0.40
codegen_flags: <defaults>
</compile_context>

<pallas_src>
import jax
import jax.numpy as jnp
from jax import lax
from jax.experimental import pallas as pl
from jax.experimental.pallas import tpu as pltpu


def _round_up(x: int, m: int) -> int:
    return ((x + m - 1) // m) * m


def _proto_scores_kernel(psq_ref, q_ref, p_ref, out_ref):
    """-||q_i - p_j||_2 for one (TQ, D) query tile against all prototypes.

    psq_ref: (1, Pp)  precomputed ||p||^2 in f32 (hoisted out of the grid loop)
    q_ref:   (TQ, D)  query embeddings tile (native dtype)
    p_ref:   (Pp, D)  all (padded) prototype embeddings (native dtype)
    out_ref: (TQ, Pp) negative euclidean distances
    """
    q = q_ref[...]
    p = p_ref[...]

    # ||q||^2 for this tile's rows only, accumulated in f32.
    q_f32 = q.astype(jnp.float32)
    q_sq = jnp.sum(q_f32 * q_f32, axis=-1, keepdims=True)            # (TQ, 1)

    # q @ p^T directly on the MXU: contract the last dims of both operands,
    # no in-kernel transpose of the prototype block, f32 accumulation.
    qp = lax.dot_general(q, p, (((1,), (1,)), ((), ())),
                         preferred_element_type=jnp.float32)          # (TQ, Pp)

    # Squared distance; clamp guards against tiny negative values from
    # catastrophic cancellation (q ~ p) which would make sqrt produce NaN.
    d2 = jnp.maximum(q_sq + psq_ref[...] - 2.0 * qp, 0.0)
    out_ref[...] = (-jnp.sqrt(d2)).astype(out_ref.dtype)


def prototypical_scores(z_query: jax.Array, z_proto: jax.Array,
                        *, tile_q: int | None = None) -> jax.Array:
    """scores[i, j] = -||z_query[i] - z_proto[j]||_2  (same as -torch.cdist)."""
    Q, D = z_query.shape
    P, D2 = z_proto.shape
    assert D == D2, "feature dims must match"

    # Query tile: 256 rows for large Q (amortizes ~0.35 us/step and fills the
    # MXU M dim; also gives >=2 steps for v7x dual-TC sharding), single
    # sublane-aligned step for tiny few-shot Q.
    if tile_q is None:
        tile_q = 256 if Q > 256 else _round_up(Q, 8)
    tile_q = _round_up(tile_q, 8)

    Q_pad = _round_up(Q, tile_q)
    P_pad = _round_up(max(P, 128), 128)   # lane-dense output / full MXU N dim

    zq = z_query if Q_pad == Q else jnp.pad(z_query, ((0, Q_pad - Q), (0, 0)))
    zp = z_proto if P_pad == P else jnp.pad(z_proto, ((0, P_pad - P), (0, 0)))

    # Hoisted: ||p||^2 computed once (f32), shaped (1, P_pad) for broadcast.
    p_sq = jnp.sum(zp.astype(jnp.float32) ** 2, axis=-1, keepdims=True).T

    out = pl.pallas_call(
        _proto_scores_kernel,
        out_shape=jax.ShapeDtypeStruct((Q_pad, P_pad), z_query.dtype),
        grid_spec=pltpu.PrefetchScalarGridSpec(
            num_scalar_prefetch=0,
            grid=(Q_pad // tile_q,),
            in_specs=[
                # ||p||^2 row: tiny, constant across the grid.
                pl.BlockSpec((1, P_pad), lambda i: (0, 0)),
                # Query rows tiled along the grid; full feature dim (lane axis).
                pl.BlockSpec((tile_q, D), lambda i: (i, 0)),
                # Prototype block constant across the grid (stays resident).
                pl.BlockSpec((P_pad, D), lambda i: (0, 0)),
            ],
            out_specs=pl.BlockSpec((tile_q, P_pad), lambda i: (i, 0)),
        ),
        compiler_params=pltpu.CompilerParams(
            dimension_semantics=("parallel",)),
    )(p_sq, zq, zp)

    return out[:Q, :P]


def reference_scores(z_query, z_proto):
    diff = z_query[:, None, :].astype(jnp.float32) - \
           z_proto[None, :, :].astype(jnp.float32)
    return -jnp.sqrt(jnp.sum(diff * diff, axis=-1))


if __name__ == "__main__":
    key = jax.random.PRNGKey(0)
    k1, k2 = jax.random.split(key)

    # Few-shot setup: 8 prototypes (classes), 16 query samples, 32-dim embeddings.
    P, Q, D = 8, 16, 32
    z_proto = jax.random.normal(k1, (P, D), dtype=jnp.float32)
    z_query = jax.random.normal(k2, (Q, D), dtype=jnp.float32)

    scores = prototypical_scores(z_query, z_proto)
    scores = jax.block_until_ready(scores)

    ref = reference_scores(z_query, z_proto)
    assert scores.shape == (Q, P)
    assert jnp.allclose(scores, ref.astype(scores.dtype), atol=1e-4, rtol=1e-4), \
        "mismatch vs reference"

    # Also exercise a non-trivial, non-divisible shape to validate the padded
    # multi-step grid path (Q not a multiple of tile_q, P not a multiple of 128).
    k3, k4 = jax.random.split(k1)
    P2, Q2, D2 = 20, 600, 128
    zp2 = jax.random.normal(k3, (P2, D2), dtype=jnp.float32)
    zq2 = jax.random.normal(k4, (Q2, D2), dtype=jnp.float32)
    s2 = jax.block_until_ready(prototypical_scores(zq2, zp2))
    assert s2.shape == (Q2, P2)
    assert jnp.allclose(s2, reference_scores(zq2, zp2).astype(s2.dtype),
                        atol=1e-3, rtol=1e-3), "mismatch vs reference (big)"

    print("KERNEL_OK")
</pallas_src>

<mosaic_0001>
module attributes {stable_mosaic.version = 11 : i64} {
  func.func @_proto_scores_kernel(%arg0: i32, %arg1: memref<1x128xf32, #tpu.memory_space<vmem>>, %arg2: memref<16x32xf32, #tpu.memory_space<vmem>>, %arg3: memref<128x32xf32, #tpu.memory_space<vmem>>, %arg4: memref<16x128xf32, #tpu.memory_space<vmem>>) attributes {dimension_semantics = [#tpu.dimension_semantics<parallel>], iteration_bounds = array<i64: 1>, scalar_prefetch = 0 : i64, scratch_operands = 0 : i64, tpu.core_type = #tpu.core_type<tc>, window_params = [{pipeline_mode = #tpu.pipeline_mode<synchronous>, transform_indices = @transform_0, window_bounds = array<i64: 1, 128>}, {transform_indices = @transform_1, window_bounds = array<i64: 16, 32>}, {pipeline_mode = #tpu.pipeline_mode<synchronous>, transform_indices = @transform_2, window_bounds = array<i64: 128, 32>}, {transform_indices = @transform_3, window_bounds = array<i64: 16, 128>}]} {
    %c0 = arith.constant 0 : index
    %c0_0 = arith.constant 0 : index
    %0 = vector.load %arg2[%c0, %c0_0] : memref<16x32xf32, #tpu.memory_space<vmem>>, vector<16x32xf32>
    %c0_1 = arith.constant 0 : index
    %c0_2 = arith.constant 0 : index
    %1 = vector.load %arg3[%c0_1, %c0_2] : memref<128x32xf32, #tpu.memory_space<vmem>>, vector<128x32xf32>
    %2 = arith.mulf %0, %0 : vector<16x32xf32>
    %cst = arith.constant dense<0.000000e+00> : vector<16xf32>
    %3 = vector.multi_reduction <add>, %2, %cst [1] : vector<16x32xf32> to vector<16xf32>
    %4 = vector.shape_cast %3 : vector<16xf32> to vector<16x1xf32>
    %cst_3 = arith.constant dense<0.000000e+00> : vector<16x128xf32>
    %5 = tpu.matmul %0, %1, %cst_3 {dimension_numbers = #tpu.dot_dimension_numbers<[1], [1], [0], [0], [0, 0, 1, 0], [], []>} : vector<16x32xf32>, vector<128x32xf32>, vector<16x128xf32> -> vector<16x128xf32>
    %c0_4 = arith.constant 0 : index
    %c0_5 = arith.constant 0 : index
    %6 = vector.load %arg1[%c0_4, %c0_5] : memref<1x128xf32, #tpu.memory_space<vmem>>, vector<1x128xf32>
    %7 = vector.broadcast %4 : vector<16x1xf32> to vector<16x128xf32>
    %8 = vector.broadcast %6 : vector<1x128xf32> to vector<16x128xf32>
    %9 = arith.addf %7, %8 : vector<16x128xf32>
    %cst_6 = arith.constant 2.000000e+00 : f32
    %10 = vector.broadcast %cst_6 : f32 to vector<16x128xf32>
    %11 = arith.mulf %10, %5 : vector<16x128xf32>
    %12 = arith.subf %9, %11 : vector<16x128xf32>
    %cst_7 = arith.constant 0.000000e+00 : f32
    %13 = vector.broadcast %cst_7 : f32 to vector<16x128xf32>
    %14 = arith.maximumf %12, %13 : vector<16x128xf32>
    %15 = math.sqrt %14 : vector<16x128xf32>
    %cst_8 = arith.constant 0.000000e+00 : f32
    %16 = vector.broadcast %cst_8 : f32 to vector<16x128xf32>
    %17 = arith.subf %16, %15 : vector<16x128xf32>
    %c0_9 = arith.constant 0 : index
    %c0_10 = arith.constant 0 : index
    %18 = vector.load %arg4[%c0_9, %c0_10] : memref<16x128xf32, #tpu.memory_space<vmem>>, vector<16x128xf32>
    tpu.vector_store %arg4[%c0_9, %c0_10], %17 {strides = array<i32>} : memref<16x128xf32, #tpu.memory_space<vmem>>, vector<16x128xf32>,
    return
  }
  func.func @transform_0(%arg0: i32) -> (i32, i32) {
    %c0_i32 = arith.constant 0 : i32
    %c0_i32_0 = arith.constant 0 : i32
    %c0_i32_1 = arith.constant 0 : i32
    return %c0_i32, %c0_i32_0 : i32, i32
  }
  func.func @transform_1(%arg0: i32) -> (i32, i32) {
    %c0_i32 = arith.constant 0 : i32
    %c0_i32_0 = arith.constant 0 : i32
    return %arg0, %c0_i32 : i32, i32
  }
  func.func @transform_2(%arg0: i32) -> (i32, i32) {
    %c0_i32 = arith.constant 0 : i32
    %c0_i32_0 = arith.constant 0 : i32
    %c0_i32_1 = arith.constant 0 : i32
    return %c0_i32, %c0_i32_0 : i32, i32
  }
  func.func @transform_3(%arg0: i32) -> (i32, i32) {
    %c0_i32 = arith.constant 0 : i32
    %c0_i32_0 = arith.constant 0 : i32
    return %arg0, %c0_i32 : i32, i32
  }
}

</mosaic_0001>

<llo_original>
// kernel: tpu_custom_call.1
$region0: #{tpu_custom_call.1}
  #allocation0 [shape = 'u32[]', space=smem, size = 0x4, offset = 0x4, fixed_abs, tag = 'smem constant byte address 0x4 - core index']
  #allocation1 [shape = 'u32[144,128]{1,0:T(1,128)}', space=vmem, size = 0x12000, scoped, tag = 'internal scratch']
  %s0 = inlined_call_operand.vmem [shape: f32[1,128], index: 0, kind: input, shape index: {}]
  %s1 = inlined_call_operand.vmem [shape: f32[16,32], index: 1, kind: input, shape index: {}]
  %s2 = inlined_call_operand.vmem [shape: f32[128,32], index: 2, kind: input, shape index: {}]
  %s3 = inlined_call_operand.hbm [shape: f32[16,128], index: 3, kind: output, shape index: {}]
  %s4 = sld [smem:[#allocation0]]
  $region22: #{tpu_custom_call.1} parent=0
    _
  %s6 = ssub.s32 1, %s4
  %s7 = scalar_select 0, %s6, %s4
  $region1: #{tpu_custom_call.1} parent=0
    #allocation2 [shape = 'u8[8192]{0}', space=vmem, size = 0x2000, scoped, tag = 'output window, operand 0, single buffered']
    #allocation3 [shape = 's32[1]{0}', space=sflag, size = 0x4, scoped, tag = 'scoped memory for tpu_custom_call.1']
    %8 = vsyncpa [#allocation3], 0
    // Predicated region
    $region2: #{tpu_custom_call.1} parent=1 // pred_check
      _
    $region3: #{tpu_custom_call.1} parent=1 // pred_check_branch
      %10 = sbr.rel (0) target = $region5
    $region4: #{tpu_custom_call.1} parent=1 // pred_region
      _
    $region5: #{tpu_custom_call.1} parent=1 // pred_fallthru
      _
    // Predicated region
    $region6: #{tpu_custom_call.1} parent=1 // pred_check
      _
    $region7: #{tpu_custom_call.1} parent=1 // pred_check_branch
      %12 = sbr.rel (0) target = $region9
    $region8: #{tpu_custom_call.1} parent=1 // pred_region
      _
    $region9: #{tpu_custom_call.1} parent=1 // pred_fallthru
      _
    // Predicated region
    $region10: #{tpu_custom_call.1} parent=1 // pred_check
      _
    $region11: #{tpu_custom_call.1} parent=1 // pred_check_branch
      %14 = sbr.rel (0) target = $region13
    $region12: #{tpu_custom_call.1} parent=1 // pred_region
      _
    $region13: #{tpu_custom_call.1} parent=1 // pred_fallthru
      _
    %v15 = vld [vmem:[%s1] sm:$0xff]
    %v16 = vld [vmem:[%s1 + $0x8] sm:$0xff]
    %v17 = vld [vmem:[%s2] sm:$0xff]
    %v18 = vld [vmem:[%s2 + $0x8] sm:$0xff]
    %v19 = vld [vmem:[%s2 + $0x10] sm:$0xff]
    %v20 = vld [vmem:[%s2 + $0x18] sm:$0xff]
    %v21 = vld [vmem:[%s2 + $0x20] sm:$0xff]
    %v22 = vld [vmem:[%s2 + $0x28] sm:$0xff]
    %v23 = vld [vmem:[%s2 + $0x30] sm:$0xff]
    %v24 = vld [vmem:[%s2 + $0x38] sm:$0xff]
    %v25 = vld [vmem:[%s2 + $0x40] sm:$0xff]
    %v26 = vld [vmem:[%s2 + $0x48] sm:$0xff]
    %v27 = vld [vmem:[%s2 + $0x50] sm:$0xff]
    %v28 = vld [vmem:[%s2 + $0x58] sm:$0xff]
    %v29 = vld [vmem:[%s2 + $0x60] sm:$0xff]
    %v30 = vld [vmem:[%s2 + $0x68] sm:$0xff]
    %v31 = vld [vmem:[%s2 + $0x70] sm:$0xff]
    %v32 = vld [vmem:[%s2 + $0x78] sm:$0xff]
    %v33 = vmul.f32 %v15, %v15
    %v34 = vmul.f32 %v16, %v16
    %vm35 = vcmask 261120
    %v36 = vsel %vm35, %v33, 0.0
    %37 = vadd.xlane.f32.xlu0 %v36
    %v38 = vpop.xlane.xlu0 %37
    %v39 = vsel %vm35, %v34, 0.0
    %40 = vadd.xlane.f32.xlu0 %v39
    %v41 = vpop.xlane.xlu0 %40
    %v43 = vsel %vm35, %v15, 0
    %v46 = vsel %vm35, %v16, 0
    %v49 = vsel %vm35, %v17, 0
    %v52 = vsel %vm35, %v18, 0
    %v55 = vsel %vm35, %v19, 0
    %v58 = vsel %vm35, %v20, 0
    %v61 = vsel %vm35, %v21, 0
    %v64 = vsel %vm35, %v22, 0
    %v67 = vsel %vm35, %v23, 0
    %v70 = vsel %vm35, %v24, 0
    %v73 = vsel %vm35, %v25, 0
    %v76 = vsel %vm35, %v26, 0
    %v79 = vsel %vm35, %v27, 0
    %v82 = vsel %vm35, %v28, 0
    %v85 = vsel %vm35, %v29, 0
    %v88 = vsel %vm35, %v30, 0
    %v91 = vsel %vm35, %v31, 0
    %v94 = vsel %vm35, %v32, 0
    %96 = vmatprep.subr.mxu0 0.0
    %97 = vmatpush1.xpose.msra.mxu0 %v94
    %98 = vmatprep.subr.mxu0 0.0
    %99 = vmatpush1.xpose.msra.mxu0 %v91
    %100 = vmatprep.subr.mxu0 0.0
    %101 = vmatpush1.xpose.msra.mxu0 %v88
    %102 = vmatprep.subr.mxu0 0.0
    %103 = vmatpush1.xpose.msra.mxu0 %v85
    %104 = vmatprep.subr.mxu0 0.0
    %105 = vmatpush1.xpose.msra.mxu0 %v82
    %106 = vmatprep.subr.mxu0 0.0
    %107 = vmatpush1.xpose.msra.mxu0 %v79
    %108 = vmatprep.subr.mxu0 0.0
    %109 = vmatpush1.xpose.msra.mxu0 %v76
    %110 = vmatprep.subr.mxu0 0.0
    %111 = vmatpush1.xpose.msra.mxu0 %v73
    %112 = vmatprep.subr.mxu0 0.0
    %113 = vmatpush1.xpose.msra.mxu0 %v70
    %114 = vmatprep.subr.mxu0 0.0
    %115 = vmatpush1.xpose.msra.mxu0 %v67
    %116 = vmatprep.subr.mxu0 0.0
    %117 = vmatpush1.xpose.msra.mxu0 %v64
    %118 = vmatprep.subr.mxu0 0.0
    %119 = vmatpush1.xpose.msra.mxu0 %v61
    %120 = vmatprep.subr.mxu0 0.0
    %121 = vmatpush1.xpose.msra.mxu0 %v58
    %122 = vmatprep.subr.mxu0 0.0
    %123 = vmatpush1.xpose.msra.mxu0 %v55
    %124 = vmatprep.subr.mxu0 0.0
    %125 = vmatpush1.xpose.msra.mxu0 %v52
    %126 = vmatprep.subr.mxu0 0.0
    %127 = vmatpush1.xpose.msra.mxu0 %v49
    %128 = vmatprep.subr.mxu0 0.0
    %129 = vmatpush2.xpose.msra.mxu0 0.0
    %130 = vmatprep.subr.mxu0 0.0
    %131 = vmatpush2.xpose.msra.mxu0 0.0
    %132 = vmatprep.subr.mxu0 0.0
    %133 = vmatpush2.xpose.msra.mxu0 0.0
    %134 = vmatprep.subr.mxu0 0.0
    %135 = vmatpush2.xpose.msra.mxu0 0.0
    %136 = vmatprep.subr.mxu0 0.0
    %137 = vmatpush2.xpose.msra.mxu0 0.0
    %138 = vmatprep.subr.mxu0 0.0
    %139 = vmatpush2.xpose.msra.mxu0 0.0
    %140 = vmatprep.subr.mxu0 0.0
    %141 = vmatpush2.xpose.msra.mxu0 0.0
    %142 = vmatprep.subr.mxu0 0.0
    %143 = vmatpush2.xpose.msra.mxu0 0.0
    %144 = vmatprep.subr.mxu0 0.0
    %145 = vmatpush2.xpose.msra.mxu0 0.0
    %146 = vmatprep.subr.mxu0 0.0
    %147 = vmatpush2.xpose.msra.mxu0 0.0
    %148 = vmatprep.subr.mxu0 0.0
    %149 = vmatpush2.xpose.msra.mxu0 0.0
    %150 = vmatprep.subr.mxu0 0.0
    %151 = vmatpush2.xpose.msra.mxu0 0.0
    %152 = vmatprep.subr.mxu0 0.0
    %153 = vmatpush2.xpose.msra.mxu0 0.0
    %154 = vmatprep.subr.mxu0 0.0
    %155 = vmatpush2.xpose.msra.mxu0 0.0
    %156 = vmatprep.subr.mxu0 0.0
    %157 = vmatpush2.xpose.msra.mxu0 0.0
    %158 = vmatprep.subr.mxu0 0.0
    %159 = vmatpush2.xpose.msra.mxu0 0.0
    %160 = vmatprep.mubr.f32.mxu0 0.0
    %161 = vmatmul.mubr.f32.gmra.mxu0 %v43
    %v162 = vpop.f32.mrf.mxu0
    %v163 = vadd.f32 0.0, %v162
    %v164 = vpop.f32.mrf.mxu0
    %165 = vmatprep.mubr.f32.mxu0 0.0
    %166 = vmatmul.mubr.f32.gmra.mxu0 %v46
    %v167 = vpop.f32.mrf.mxu0
    %v168 = vadd.f32 0.0, %v167
    %v169 = vpop.f32.mrf.mxu0
    %170 = vdwg.mxu0
    %v171 = vld [vmem:[%s0] sm:$0x1]
    %v173 = vlaneseq
    %v174 = vshrl.u32 %v173, 7
    %v175 = vsub.s32 0, %v174
    %v176 = vrot.slane %v171, %v175
    %v178 = vadd.f32 %v38, %v176
    %v179 = vadd.f32 %v41, %v176
    %v180 = vmul.f32 %v163, 2.0
    %v181 = vmul.f32 %v168, 2.0
    %v182 = vsub.f32 %v178, %v180
    %v183 = vsub.f32 %v179, %v181
    %v184 = vmax.f32 %v182, 0.0
    %v185 = vmax.f32 %v183, 0.0
    %v186 = vrsqrt.pop %v184
    %v187 = vmul.f32 %v184, %v186
    %vm188 = vcmp.eq.f32.partialorder %v184, inf
    %v189 = vsel %vm188, %v184, %v187
    %vm190 = vcmp.eq.f32.partialorder %v184, 0.0
    %v191 = vand.u32 %v184, 2147483648
    %v192 = vsel %vm190, %v191, %v189
    %v193 = vrsqrt.pop %v185
    %v194 = vmul.f32 %v185, %v193
    %vm195 = vcmp.eq.f32.partialorder %v185, inf
    %v196 = vsel %vm195, %v185, %v194
    %vm197 = vcmp.eq.f32.partialorder %v185, 0.0
    %v198 = vand.u32 %v185, 2147483648
    %v199 = vsel %vm197, %v198, %v196
    %v200 = vsub.f32 0.0, %v192
    %v201 = vsub.f32 0.0, %v199
    %202 = vst [vmem:[#allocation2] sm:$0xff] %v200
    %203 = vst [vmem:[#allocation2 + $0x8] sm:$0xff] %v201
    // Predicated region
    $region14: #{tpu_custom_call.1} parent=1 // pred_check
      _
    $region15: #{tpu_custom_call.1} parent=1 // pred_check_branch
      %205 = sbr.rel (0) target = $region17
    $region16: #{tpu_custom_call.1} parent=1 // pred_region
      %s207 = ssub.s32 256, 256
      %208 = vsyncadd [#allocation3], %s207
      %s209 = sshll.u32 [#allocation2], 4
      %s210 = int_to_ptr.vmem [resolvable:$true] %s209
      %215 = dma.vmem_to_hbm [thread:$0]  %s210, 256, %s3, [#allocation3], 128, 128, 8
    $region17: #{tpu_custom_call.1} parent=1 // pred_fallthru
      _
    // Predicated region
    $region18: #{tpu_custom_call.1} parent=1 // pred_check
      _
    $region19: #{tpu_custom_call.1} parent=1 // pred_check_branch
      %217 = sbr.rel (0) target = $region21
    $region20: #{tpu_custom_call.1} parent=1 // pred_region
      %218 = dma.done [#allocation3], 256
    $region21: #{tpu_custom_call.1} parent=1 // pred_fallthru
      _
    %219 = vsyncpa [#allocation3], 1

</llo_original>
